<compile_context>
chip_gen: v7x
topology: tpu7x:2x2x1
jax: 0.10.0
libtpu: 0.0.40
codegen_flags: <defaults>
</compile_context>

<pallas_src>
import functools

import jax
import jax.numpy as jnp
from jax.experimental import pallas as pl
from jax.experimental.pallas import tpu as pltpu


STRIP = 32  # rows per in-register peel strip (multiple of 8 sublanes)


def _round_up(x, m):
    return ((x + m - 1) // m) * m


def _mb_projection_kernel(x_ref, wt_ref, o_ref, *, hash_length, strip,
                          exact_ties):
    """Fused random projection + top-`hash_length` WTA sparsification.

    x_ref : [TB, IN]   input tile                (VMEM, f32, streamed)
    wt_ref: [IN, OUT]  projection matrix^T (0/1) (VMEM, f32, resident)
    o_ref : [TB, OUT]  sparsified projection     (VMEM, f32, streamed)

    The tile is processed in `strip`-row sub-blocks so that the strip's
    projection (s) and working copy (work) stay register-resident across the
    statically unrolled peel loop.
    """
    neg = jnp.finfo(jnp.float32).min
    n_strips = x_ref.shape[0] // strip
    out_dim = wt_ref.shape[1]

    def do_strip(si, carry):
        r0 = pl.multiple_of(si * strip, strip)
        x = x_ref[pl.ds(r0, strip), :]
        # MXU projection (K=32 — not the critical path; no weight repacking).
        s = jnp.dot(x, wt_ref[...], preferred_element_type=jnp.float32)

        work = s
        kth = jnp.full((strip, 1), neg, dtype=jnp.float32)
        if not exact_ties:
            # Fast peel: ONE XLU lane-reduce per iteration; remove all lanes
            # tied with the current max. `kth` ends up as the hash_length-th
            # largest *distinct* value (== lax.top_k's k-th value whenever the
            # activations are tie-free, which is the generic case for
            # continuous inputs).
            for it in range(hash_length):              # static unroll (k=16)
                kth = jnp.max(work, axis=-1, keepdims=True)        # XLU
                if it + 1 < hash_length:               # last mask not needed
                    work = jnp.where(work == kth, neg, work)       # VPU
        else:
            # Tie-exact path (matches lax.top_k even on exact ties): remove
            # exactly one lane per iteration (first tied lane). Costs a second
            # XLU reduce per iteration; gated behind a flag.
            lane = jax.lax.broadcasted_iota(jnp.int32, (strip, out_dim), 1)
            for it in range(hash_length):
                kth = jnp.max(work, axis=-1, keepdims=True)        # XLU
                if it + 1 < hash_length:
                    first = jnp.min(jnp.where(work == kth, lane, out_dim),
                                    axis=-1, keepdims=True)        # XLU
                    work = jnp.where(lane == first, neg, work)     # VPU

        # Winner-take-all: keep values >= k-th largest, zero the rest.
        o_ref[pl.ds(r0, strip), :] = jnp.where(s >= kth, s, 0.0).astype(
            o_ref.dtype)
        return carry

    jax.lax.fori_loop(0, n_strips, do_strip, 0)


def prepare_projection_weight(weight):
    """One-time transform of the fixed projection matrix: [OUT, IN] -> [IN, OUT].

    Kept in f32: at these sizes (IN*OUT = 32*256 = 32 KiB) the resident weight
    is a negligible VMEM cost, so the bf16-resident trick (and its per-step
    upcast) is not worth it. For very large IN*OUT, store bf16 and feed the
    MXU directly instead.
    """
    return jnp.asarray(weight, jnp.float32).T


def _choose_tile(batch, block_b):
    """Pick (batch tile, strip).

    Tile is a multiple of the strip, capped at block_b, and sized as
    ~round_up(ceil(B / 2k), STRIP) so the 1-D "parallel" grid has an even
    number of steps >= 2 whenever B > one strip (lets v7x shard the batch
    across both TensorCores; harmless on single-TC v5e/v6e).
    """
    if batch <= STRIP:
        tb = _round_up(max(batch, 1), 8)
        return tb, tb                      # tiny batch: one small tile
    cap = max(block_b, STRIP)
    k = 1
    while True:
        tb = _round_up(-(-batch // (2 * k)), STRIP)
        if tb <= cap:
            return tb, STRIP
        k += 1


def mb_projection(x, wt, hash_length, *, block_b=512, exact_ties=False):
    """x: [B, IN] f32.  wt: [IN, OUT] (output of prepare_projection_weight)."""
    B, IN = x.shape
    IN_w, OUT = wt.shape
    assert IN == IN_w, (IN, IN_w)
    assert 1 <= hash_length <= OUT

    TB, strip = _choose_tile(B, block_b)
    B_pad = _round_up(B, TB)
    if B_pad != B:
        x = jnp.pad(x, ((0, B_pad - B), (0, 0)))   # zero rows, sliced off below

    # VMEM budget: double-buffered x/out tiles + resident weight + per-strip
    # working set. Only raise the scoped limit when it would exceed the
    # smallest per-generation default (16 MiB on v5e), and cap at 48 MiB so we
    # never request all of v7x's 64 MiB physical VMEM.
    need = (2 * TB * IN * 4 + 2 * TB * OUT * 4 + 2 * IN * OUT * 4
            + 6 * strip * OUT * 4)
    vmem_limit = None if need <= (12 << 20) else min(
        _round_up(2 * need, 1 << 20), 48 << 20)

    kernel = functools.partial(_mb_projection_kernel, hash_length=hash_length,
                               strip=strip, exact_ties=exact_ties)
    out = pl.pallas_call(
        kernel,
        out_shape=jax.ShapeDtypeStruct((B_pad, OUT), jnp.float32),
        grid=(B_pad // TB,),
        in_specs=[
            pl.BlockSpec((TB, IN), lambda i: (i, 0)),    # streamed per step
            pl.BlockSpec((IN, OUT), lambda i: (0, 0)),   # resident weight
        ],
        out_specs=pl.BlockSpec((TB, OUT), lambda i: (i, 0)),
        compiler_params=pltpu.CompilerParams(
            dimension_semantics=("parallel",),           # v7x: 2 TCs share batch
            vmem_limit_bytes=vmem_limit),
    )(x, wt)
    return out[:B] if B_pad != B else out


# ----------------------------------------------------------------------------
# Test helpers (pure JAX references)
# ----------------------------------------------------------------------------
def make_rand_proj_matrix(key, out_features, in_features, nb_proj_entries):
    """Deterministic stand-in for OlfactoryModel.create_rand_proj_matrix():
    binary matrix, each output row connects to `nb_proj_entries` random inputs."""
    r = jax.random.uniform(key, (out_features, in_features))
    idx = jnp.argsort(r, axis=-1)[:, :nb_proj_entries]
    w = jnp.zeros((out_features, in_features), jnp.float32)
    w = w.at[jnp.arange(out_features)[:, None], idx].set(1.0)
    return w


def _kth_topk(s, k):
    """k-th largest counted with multiplicity (lax.top_k semantics)."""
    return jax.lax.top_k(s, k)[0][:, -1:]


def _kth_distinct(s, k):
    """k-th largest *distinct* value (semantics of the fast mask-all-ties peel)."""
    srt = jnp.sort(s, axis=-1)[:, ::-1]
    is_new = jnp.concatenate(
        [jnp.ones_like(srt[:, :1], dtype=bool), srt[:, 1:] != srt[:, :-1]],
        axis=-1)
    rank = jnp.cumsum(is_new.astype(jnp.int32), axis=-1)
    return jnp.min(jnp.where(rank <= k, srt, jnp.inf), axis=-1, keepdims=True)


def _check(out, x, weight, hash_length, kth_fn, atol=1e-4):
    """Compare the kernel output against a pure-JAX WTA reference; entries
    within `atol` of the threshold are allowed to disagree (tie / matmul
    rounding boundary — the MXU and XLA may round the projection differently)."""
    s = jnp.dot(x, weight.T, precision=jax.lax.Precision.HIGHEST)
    kth = kth_fn(s, hash_length)
    ref = jnp.where(s >= kth, s, 0.0)
    ok = jnp.isclose(out, ref, atol=atol) | (jnp.abs(s - kth) <= atol)
    assert bool(jnp.all(ok)), "kernel output mismatch vs reference"
    assert bool(jnp.all(jnp.sum(out != 0.0, axis=-1) >= hash_length))


if __name__ == "__main__":
    # params = {'NB_FEATURES': 32, 'DIM_EXPLOSION_FACTOR': 8,
    #           'NB_PROJ_ENTRIES': 6, 'HASH_LENGTH': 16}
    NB_FEATURES = 32
    DIM_EXPLOSION_FACTOR = 8
    NB_PROJ_ENTRIES = 6
    HASH_LENGTH = 16

    in_features = NB_FEATURES
    out_features = NB_FEATURES * DIM_EXPLOSION_FACTOR

    key = jax.random.PRNGKey(0)
    k_w, k_x, k_x2 = jax.random.split(key, 3)
    weight = make_rand_proj_matrix(k_w, out_features, in_features,
                                   NB_PROJ_ENTRIES)
    wt = prepare_projection_weight(weight)   # fixed, prepared once

    # --- toy case from the spec: batch=2 (single tile, single strip) --------
    BATCH = 2
    x = jax.random.uniform(k_x, (BATCH, in_features), dtype=jnp.float32)

    out = jax.block_until_ready(mb_projection(x, wt, HASH_LENGTH))
    assert out.shape == (BATCH, out_features)
    _check(out, x, weight, HASH_LENGTH, _kth_distinct)

    out_exact = jax.block_until_ready(
        mb_projection(x, wt, HASH_LENGTH, exact_ties=True))
    _check(out_exact, x, weight, HASH_LENGTH, _kth_topk)

    # --- larger batch: padding + 2-step "parallel" grid + multi-strip loop --
    BATCH2 = 300
    x2 = jax.random.uniform(k_x2, (BATCH2, in_features), dtype=jnp.float32)

    out2 = jax.block_until_ready(mb_projection(x2, wt, HASH_LENGTH))
    assert out2.shape == (BATCH2, out_features)
    _check(out2, x2, weight, HASH_LENGTH, _kth_distinct)

    out2_exact = jax.block_until_ready(
        mb_projection(x2, wt, HASH_LENGTH, exact_ties=True))
    _check(out2_exact, x2, weight, HASH_LENGTH, _kth_topk)

    print("KERNEL_OK")
</pallas_src>

<mosaic_0001>
module attributes {stable_mosaic.version = 11 : i64} {
  func.func @_mb_projection_kernel(%arg0: i32, %arg1: memref<8x32xf32, #tpu.memory_space<vmem>>, %arg2: memref<32x256xf32, #tpu.memory_space<vmem>>, %arg3: memref<8x256xf32, #tpu.memory_space<vmem>>) attributes {dimension_semantics = [#tpu.dimension_semantics<parallel>], iteration_bounds = array<i64: 1>, scalar_prefetch = 0 : i64, scratch_operands = 0 : i64, tpu.core_type = #tpu.core_type<tc>, window_params = [{transform_indices = @transform_0, window_bounds = array<i64: 8, 32>}, {pipeline_mode = #tpu.pipeline_mode<synchronous>, transform_indices = @transform_1, window_bounds = array<i64: 32, 256>}, {transform_indices = @transform_2, window_bounds = array<i64: 8, 256>}]} {
    %c0_i32 = arith.constant 0 : i32
    %c8_i32 = arith.constant 8 : i32
    %0 = arith.muli %c0_i32, %c8_i32 : i32
    %1 = tpu.assume_multiple %0, 8 : i32
    %2 = arith.index_cast %1 : i32 to index
    %c0 = arith.constant 0 : index
    %3 = vector.load %arg1[%2, %c0] : memref<8x32xf32, #tpu.memory_space<vmem>>, vector<8x32xf32>
    %c0_0 = arith.constant 0 : index
    %c0_1 = arith.constant 0 : index
    %4 = vector.load %arg2[%c0_0, %c0_1] : memref<32x256xf32, #tpu.memory_space<vmem>>, vector<32x256xf32>
    %cst = arith.constant dense<0.000000e+00> : vector<8x256xf32>
    %5 = tpu.matmul %3, %4, %cst {dimension_numbers = #tpu.dot_dimension_numbers<[1], [0], [0], [1], [0, 0, 1, 1], [], []>} : vector<8x32xf32>, vector<32x256xf32>, vector<8x256xf32> -> vector<8x256xf32>
    %cst_2 = arith.constant dense<0xFF800000> : vector<8xf32>
    %6 = vector.multi_reduction <maximumf>, %5, %cst_2 [1] : vector<8x256xf32> to vector<8xf32>
    %7 = vector.shape_cast %6 : vector<8xf32> to vector<8x1xf32>
    %8 = vector.broadcast %7 : vector<8x1xf32> to vector<8x256xf32>
    %9 = arith.cmpf oeq, %5, %8 : vector<8x256xf32>
    %cst_3 = arith.constant -3.40282347E+38 : f32
    %10 = vector.broadcast %cst_3 : f32 to vector<8x256xf32>
    %11 = arith.select %9, %10, %5 : vector<8x256xi1>, vector<8x256xf32>
    %cst_4 = arith.constant dense<0xFF800000> : vector<8xf32>
    %12 = vector.multi_reduction <maximumf>, %11, %cst_4 [1] : vector<8x256xf32> to vector<8xf32>
    %13 = vector.shape_cast %12 : vector<8xf32> to vector<8x1xf32>
    %14 = vector.broadcast %13 : vector<8x1xf32> to vector<8x256xf32>
    %15 = arith.cmpf oeq, %11, %14 : vector<8x256xf32>
    %cst_5 = arith.constant -3.40282347E+38 : f32
    %16 = vector.broadcast %cst_5 : f32 to vector<8x256xf32>
    %17 = arith.select %15, %16, %11 : vector<8x256xi1>, vector<8x256xf32>
    %cst_6 = arith.constant dense<0xFF800000> : vector<8xf32>
    %18 = vector.multi_reduction <maximumf>, %17, %cst_6 [1] : vector<8x256xf32> to vector<8xf32>
    %19 = vector.shape_cast %18 : vector<8xf32> to vector<8x1xf32>
    %20 = vector.broadcast %19 : vector<8x1xf32> to vector<8x256xf32>
    %21 = arith.cmpf oeq, %17, %20 : vector<8x256xf32>
    %cst_7 = arith.constant -3.40282347E+38 : f32
    %22 = vector.broadcast %cst_7 : f32 to vector<8x256xf32>
    %23 = arith.select %21, %22, %17 : vector<8x256xi1>, vector<8x256xf32>
    %cst_8 = arith.constant dense<0xFF800000> : vector<8xf32>
    %24 = vector.multi_reduction <maximumf>, %23, %cst_8 [1] : vector<8x256xf32> to vector<8xf32>
    %25 = vector.shape_cast %24 : vector<8xf32> to vector<8x1xf32>
    %26 = vector.broadcast %25 : vector<8x1xf32> to vector<8x256xf32>
    %27 = arith.cmpf oeq, %23, %26 : vector<8x256xf32>
    %cst_9 = arith.constant -3.40282347E+38 : f32
    %28 = vector.broadcast %cst_9 : f32 to vector<8x256xf32>
    %29 = arith.select %27, %28, %23 : vector<8x256xi1>, vector<8x256xf32>
    %cst_10 = arith.constant dense<0xFF800000> : vector<8xf32>
    %30 = vector.multi_reduction <maximumf>, %29, %cst_10 [1] : vector<8x256xf32> to vector<8xf32>
    %31 = vector.shape_cast %30 : vector<8xf32> to vector<8x1xf32>
    %32 = vector.broadcast %31 : vector<8x1xf32> to vector<8x256xf32>
    %33 = arith.cmpf oeq, %29, %32 : vector<8x256xf32>
    %cst_11 = arith.constant -3.40282347E+38 : f32
    %34 = vector.broadcast %cst_11 : f32 to vector<8x256xf32>
    %35 = arith.select %33, %34, %29 : vector<8x256xi1>, vector<8x256xf32>
    %cst_12 = arith.constant dense<0xFF800000> : vector<8xf32>
    %36 = vector.multi_reduction <maximumf>, %35, %cst_12 [1] : vector<8x256xf32> to vector<8xf32>
    %37 = vector.shape_cast %36 : vector<8xf32> to vector<8x1xf32>
    %38 = vector.broadcast %37 : vector<8x1xf32> to vector<8x256xf32>
    %39 = arith.cmpf oeq, %35, %38 : vector<8x256xf32>
    %cst_13 = arith.constant -3.40282347E+38 : f32
    %40 = vector.broadcast %cst_13 : f32 to vector<8x256xf32>
    %41 = arith.select %39, %40, %35 : vector<8x256xi1>, vector<8x256xf32>
    %cst_14 = arith.constant dense<0xFF800000> : vector<8xf32>
    %42 = vector.multi_reduction <maximumf>, %41, %cst_14 [1] : vector<8x256xf32> to vector<8xf32>
    %43 = vector.shape_cast %42 : vector<8xf32> to vector<8x1xf32>
    %44 = vector.broadcast %43 : vector<8x1xf32> to vector<8x256xf32>
    %45 = arith.cmpf oeq, %41, %44 : vector<8x256xf32>
    %cst_15 = arith.constant -3.40282347E+38 : f32
    %46 = vector.broadcast %cst_15 : f32 to vector<8x256xf32>
    %47 = arith.select %45, %46, %41 : vector<8x256xi1>, vector<8x256xf32>
    %cst_16 = arith.constant dense<0xFF800000> : vector<8xf32>
    %48 = vector.multi_reduction <maximumf>, %47, %cst_16 [1] : vector<8x256xf32> to vector<8xf32>
    %49 = vector.shape_cast %48 : vector<8xf32> to vector<8x1xf32>
    %50 = vector.broadcast %49 : vector<8x1xf32> to vector<8x256xf32>
    %51 = arith.cmpf oeq, %47, %50 : vector<8x256xf32>
    %cst_17 = arith.constant -3.40282347E+38 : f32
    %52 = vector.broadcast %cst_17 : f32 to vector<8x256xf32>
    %53 = arith.select %51, %52, %47 : vector<8x256xi1>, vector<8x256xf32>
    %cst_18 = arith.constant dense<0xFF800000> : vector<8xf32>
    %54 = vector.multi_reduction <maximumf>, %53, %cst_18 [1] : vector<8x256xf32> to vector<8xf32>
    %55 = vector.shape_cast %54 : vector<8xf32> to vector<8x1xf32>
    %56 = vector.broadcast %55 : vector<8x1xf32> to vector<8x256xf32>
    %57 = arith.cmpf oeq, %53, %56 : vector<8x256xf32>
    %cst_19 = arith.constant -3.40282347E+38 : f32
    %58 = vector.broadcast %cst_19 : f32 to vector<8x256xf32>
    %59 = arith.select %57, %58, %53 : vector<8x256xi1>, vector<8x256xf32>
    %cst_20 = arith.constant dense<0xFF800000> : vector<8xf32>
    %60 = vector.multi_reduction <maximumf>, %59, %cst_20 [1] : vector<8x256xf32> to vector<8xf32>
    %61 = vector.shape_cast %60 : vector<8xf32> to vector<8x1xf32>
    %62 = vector.broadcast %61 : vector<8x1xf32> to vector<8x256xf32>
    %63 = arith.cmpf oeq, %59, %62 : vector<8x256xf32>
    %cst_21 = arith.constant -3.40282347E+38 : f32
    %64 = vector.broadcast %cst_21 : f32 to vector<8x256xf32>
    %65 = arith.select %63, %64, %59 : vector<8x256xi1>, vector<8x256xf32>
    %cst_22 = arith.constant dense<0xFF800000> : vector<8xf32>
    %66 = vector.multi_reduction <maximumf>, %65, %cst_22 [1] : vector<8x256xf32> to vector<8xf32>
    %67 = vector.shape_cast %66 : vector<8xf32> to vector<8x1xf32>
    %68 = vector.broadcast %67 : vector<8x1xf32> to vector<8x256xf32>
    %69 = arith.cmpf oeq, %65, %68 : vector<8x256xf32>
    %cst_23 = arith.constant -3.40282347E+38 : f32
    %70 = vector.broadcast %cst_23 : f32 to vector<8x256xf32>
    %71 = arith.select %69, %70, %65 : vector<8x256xi1>, vector<8x256xf32>
    %cst_24 = arith.constant dense<0xFF800000> : vector<8xf32>
    %72 = vector.multi_reduction <maximumf>, %71, %cst_24 [1] : vector<8x256xf32> to vector<8xf32>
    %73 = vector.shape_cast %72 : vector<8xf32> to vector<8x1xf32>
    %74 = vector.broadcast %73 : vector<8x1xf32> to vector<8x256xf32>
    %75 = arith.cmpf oeq, %71, %74 : vector<8x256xf32>
    %cst_25 = arith.constant -3.40282347E+38 : f32
    %76 = vector.broadcast %cst_25 : f32 to vector<8x256xf32>
    %77 = arith.select %75, %76, %71 : vector<8x256xi1>, vector<8x256xf32>
    %cst_26 = arith.constant dense<0xFF800000> : vector<8xf32>
    %78 = vector.multi_reduction <maximumf>, %77, %cst_26 [1] : vector<8x256xf32> to vector<8xf32>
    %79 = vector.shape_cast %78 : vector<8xf32> to vector<8x1xf32>
    %80 = vector.broadcast %79 : vector<8x1xf32> to vector<8x256xf32>
    %81 = arith.cmpf oeq, %77, %80 : vector<8x256xf32>
    %cst_27 = arith.constant -3.40282347E+38 : f32
    %82 = vector.broadcast %cst_27 : f32 to vector<8x256xf32>
    %83 = arith.select %81, %82, %77 : vector<8x256xi1>, vector<8x256xf32>
    %cst_28 = arith.constant dense<0xFF800000> : vector<8xf32>
    %84 = vector.multi_reduction <maximumf>, %83, %cst_28 [1] : vector<8x256xf32> to vector<8xf32>
    %85 = vector.shape_cast %84 : vector<8xf32> to vector<8x1xf32>
    %86 = vector.broadcast %85 : vector<8x1xf32> to vector<8x256xf32>
    %87 = arith.cmpf oeq, %83, %86 : vector<8x256xf32>
    %cst_29 = arith.constant -3.40282347E+38 : f32
    %88 = vector.broadcast %cst_29 : f32 to vector<8x256xf32>
    %89 = arith.select %87, %88, %83 : vector<8x256xi1>, vector<8x256xf32>
    %cst_30 = arith.constant dense<0xFF800000> : vector<8xf32>
    %90 = vector.multi_reduction <maximumf>, %89, %cst_30 [1] : vector<8x256xf32> to vector<8xf32>
    %91 = vector.shape_cast %90 : vector<8xf32> to vector<8x1xf32>
    %92 = vector.broadcast %91 : vector<8x1xf32> to vector<8x256xf32>
    %93 = arith.cmpf oeq, %89, %92 : vector<8x256xf32>
    %cst_31 = arith.constant -3.40282347E+38 : f32
    %94 = vector.broadcast %cst_31 : f32 to vector<8x256xf32>
    %95 = arith.select %93, %94, %89 : vector<8x256xi1>, vector<8x256xf32>
    %cst_32 = arith.constant dense<0xFF800000> : vector<8xf32>
    %96 = vector.multi_reduction <maximumf>, %95, %cst_32 [1] : vector<8x256xf32> to vector<8xf32>
    %97 = vector.shape_cast %96 : vector<8xf32> to vector<8x1xf32>
    %98 = vector.broadcast %97 : vector<8x1xf32> to vector<8x256xf32>
    %99 = arith.cmpf oge, %5, %98 : vector<8x256xf32>
    %cst_33 = arith.constant 0.000000e+00 : f32
    %100 = vector.broadcast %cst_33 : f32 to vector<8x256xf32>
    %101 = arith.select %99, %5, %100 : vector<8x256xi1>, vector<8x256xf32>
    %102 = arith.index_cast %1 : i32 to index
    %c0_34 = arith.constant 0 : index
    %103 = vector.load %arg3[%102, %c0_34] : memref<8x256xf32, #tpu.memory_space<vmem>>, vector<8x256xf32>
    tpu.vector_store %arg3[%102, %c0_34], %101 {strides = array<i32>} : memref<8x256xf32, #tpu.memory_space<vmem>>, vector<8x256xf32>,
    %c1_i32 = arith.constant 1 : i32
    return
  }
  func.func @transform_0(%arg0: i32) -> (i32, i32) {
    %c0_i32 = arith.constant 0 : i32
    %c0_i32_0 = arith.constant 0 : i32
    return %arg0, %c0_i32 : i32, i32
  }
  func.func @transform_1(%arg0: i32) -> (i32, i32) {
    %c0_i32 = arith.constant 0 : i32
    %c0_i32_0 = arith.constant 0 : i32
    %c0_i32_1 = arith.constant 0 : i32
    return %c0_i32, %c0_i32_0 : i32, i32
  }
  func.func @transform_2(%arg0: i32) -> (i32, i32) {
    %c0_i32 = arith.constant 0 : i32
    %c0_i32_0 = arith.constant 0 : i32
    return %arg0, %c0_i32 : i32, i32
  }
}

</mosaic_0001>

<llo_original>
// kernel: tpu_custom_call.1
$region0: #{tpu_custom_call.1}
  #allocation0 [shape = 'u32[]', space=smem, size = 0x4, offset = 0x4, fixed_abs, tag = 'smem constant byte address 0x4 - core index']
  #allocation1 [shape = 'u32[144,128]{1,0:T(1,128)}', space=vmem, size = 0x12000, scoped, tag = 'internal scratch']
  %s0 = inlined_call_operand.hbm [shape: f32[8,32], index: 0, kind: input, shape index: {}]
  %s1 = inlined_call_operand.hbm [shape: f32[32,256], index: 1, kind: input, shape index: {}]
  %s2 = inlined_call_operand.hbm [shape: f32[8,256], index: 2, kind: output, shape index: {}]
  %s3 = sld [smem:[#allocation0]]
  $region26: #{tpu_custom_call.1} parent=0
    _
  %s5 = ssub.s32 1, %s3
  %s6 = scalar_select 0, %s5, %s3
  $region1: #{tpu_custom_call.1} parent=0
    #allocation2 [shape = 'u8[4096]{0}', space=vmem, size = 0x1000, scoped, tag = 'input window, operand 0, single buffered']
    #allocation3 [shape = 's32[1]{0}', space=sflag, size = 0x4, scoped, tag = 'scoped memory for tpu_custom_call.1']
    #allocation4 [shape = 's32[1]{0}', space=sflag, size = 0x4, scoped, tag = 'scoped memory for tpu_custom_call.1']
    #allocation5 [shape = 'u8[32768]{0}', space=vmem, size = 0x8000, scoped, tag = 'input window, operand 1, single buffered']
    #allocation6 [shape = 's32[1]{0}', space=sflag, size = 0x4, scoped, tag = 'scoped memory for tpu_custom_call.1']
    #allocation7 [shape = 'u8[8192]{0}', space=vmem, size = 0x2000, scoped, tag = 'output window, operand 0, single buffered']
    %7 = vsyncpa [#allocation3], 0
    %8 = vsyncpa [#allocation6], 0
    %9 = vsyncpa [#allocation4], 0
    // Predicated region
    $region2: #{tpu_custom_call.1} parent=1 // pred_check
      _
    $region3: #{tpu_custom_call.1} parent=1 // pred_check_branch
      %11 = sbr.rel (0) target = $region5
    $region4: #{tpu_custom_call.1} parent=1 // pred_region
      %s13 = ssub.s32 128, 128
      %14 = vsyncadd [#allocation3], %s13
      %s16 = sshll.u32 [#allocation2], 4
      %s17 = int_to_ptr.vmem [resolvable:$true] %s16
      %19 = dma.hbm_to_vmem [thread:$0]  %s0, 128, %s17, [#allocation3]
    $region5: #{tpu_custom_call.1} parent=1 // pred_fallthru
      _
    // Predicated region
    $region6: #{tpu_custom_call.1} parent=1 // pred_check
      _
    $region7: #{tpu_custom_call.1} parent=1 // pred_check_branch
      %21 = sbr.rel (0) target = $region9
    $region8: #{tpu_custom_call.1} parent=1 // pred_region
      %s23 = ssub.s32 1024, 1024
      %24 = vsyncadd [#allocation6], %s23
      %s25 = sshll.u32 [#allocation5], 4
      %s26 = int_to_ptr.vmem [resolvable:$true] %s25
      %31 = dma.hbm_to_vmem [thread:$0]  %s1, 1024, %s26, [#allocation6], 256, 256, 16
    $region9: #{tpu_custom_call.1} parent=1 // pred_fallthru
      _
    // Predicated region
    $region10: #{tpu_custom_call.1} parent=1 // pred_check
      _
    $region11: #{tpu_custom_call.1} parent=1 // pred_check_branch
      %33 = sbr.rel (0) target = $region13
    $region12: #{tpu_custom_call.1} parent=1 // pred_region
      %34 = dma.done [#allocation3], 128
    $region13: #{tpu_custom_call.1} parent=1 // pred_fallthru
      _
    // Predicated region
    $region14: #{tpu_custom_call.1} parent=1 // pred_check
      _
    $region15: #{tpu_custom_call.1} parent=1 // pred_check_branch
      %36 = sbr.rel (0) target = $region17
    $region16: #{tpu_custom_call.1} parent=1 // pred_region
      %37 = dma.done [#allocation6], 1024
    $region17: #{tpu_custom_call.1} parent=1 // pred_fallthru
      _
    %v38 = vld [vmem:[#allocation2] sm:$0xff]
    %v39 = vld [vmem:[#allocation5] sm:$0xff]
    %v40 = vld [vmem:[#allocation5 + $0x8] sm:$0xff]
    %v41 = vld [vmem:[#allocation5 + $0x10] sm:$0xff]
    %v42 = vld [vmem:[#allocation5 + $0x18] sm:$0xff]
    %v43 = vld [vmem:[#allocation5 + $0x20] sm:$0xff]
    %v44 = vld [vmem:[#allocation5 + $0x28] sm:$0xff]
    %v45 = vld [vmem:[#allocation5 + $0x30] sm:$0xff]
    %v46 = vld [vmem:[#allocation5 + $0x38] sm:$0xff]
    %vm47 = vcmask 261120
    %v49 = vsel %vm47, %v38, 0
    %51 = vmatprep.subr.mxu0 %v40
    %52 = vmatpush1.msra.mxu0 %v39
    %53 = vmatprep.subr.mxu0 %v42
    %54 = vmatpush1.msra.mxu0 %v41
    %55 = vmatprep.subr.mxu0 %v44
    %56 = vmatpush1.msra.mxu0 %v43
    %57 = vmatprep.subr.mxu0 %v46
    %58 = vmatpush1.msra.mxu0 %v45
    %59 = vmatprep.subr.mxu0 0.0
    %60 = vmatpush1.msra.mxu0 0.0
    %61 = vmatprep.subr.mxu0 0.0
    %62 = vmatpush1.msra.mxu0 0.0
    %63 = vmatprep.subr.mxu0 0.0
    %64 = vmatpush1.msra.mxu0 0.0
    %65 = vmatprep.subr.mxu0 0.0
    %66 = vmatpush1.msra.mxu0 0.0
    %67 = vmatprep.subr.mxu0 0.0
    %68 = vmatpush1.msra.mxu0 0.0
    %69 = vmatprep.subr.mxu0 0.0
    %70 = vmatpush1.msra.mxu0 0.0
    %71 = vmatprep.subr.mxu0 0.0
    %72 = vmatpush1.msra.mxu0 0.0
    %73 = vmatprep.subr.mxu0 0.0
    %74 = vmatpush1.msra.mxu0 0.0
    %75 = vmatprep.subr.mxu0 0.0
    %76 = vmatpush1.msra.mxu0 0.0
    %77 = vmatprep.subr.mxu0 0.0
    %78 = vmatpush1.msra.mxu0 0.0
    %79 = vmatprep.subr.mxu0 0.0
    %80 = vmatpush1.msra.mxu0 0.0
    %81 = vmatprep.subr.mxu0 0.0
    %82 = vmatpush1.msra.mxu0 0.0
    %83 = vmatprep.subr.mxu0 0.0
    %84 = vmatpush1.msra.mxu0 0.0
    %85 = vmatprep.subr.mxu0 0.0
    %86 = vmatpush1.msra.mxu0 0.0
    %87 = vmatprep.subr.mxu0 0.0
    %88 = vmatpush1.msra.mxu0 0.0
    %89 = vmatprep.subr.mxu0 0.0
    %90 = vmatpush1.msra.mxu0 0.0
    %91 = vmatprep.subr.mxu0 0.0
    %92 = vmatpush1.msra.mxu0 0.0
    %93 = vmatprep.subr.mxu0 0.0
    %94 = vmatpush1.msra.mxu0 0.0
    %95 = vmatprep.subr.mxu0 0.0
    %96 = vmatpush1.msra.mxu0 0.0
    %97 = vmatprep.subr.mxu0 0.0
    %98 = vmatpush1.msra.mxu0 0.0
    %99 = vmatprep.subr.mxu0 0.0
    %100 = vmatpush1.msra.mxu0 0.0
    %101 = vmatprep.subr.mxu0 0.0
    %102 = vmatpush1.msra.mxu0 0.0
    %103 = vmatprep.subr.mxu0 0.0
    %104 = vmatpush1.msra.mxu0 0.0
    %105 = vmatprep.subr.mxu0 0.0
    %106 = vmatpush1.msra.mxu0 0.0
    %107 = vmatprep.subr.mxu0 0.0
    %108 = vmatpush1.msra.mxu0 0.0
    %109 = vmatprep.subr.mxu0 0.0
    %110 = vmatpush1.msra.mxu0 0.0
    %111 = vmatprep.subr.mxu0 0.0
    %112 = vmatpush1.msra.mxu0 0.0
    %113 = vmatprep.subr.mxu0 0.0
    %114 = vmatpush1.msra.mxu0 0.0
    %115 = vmatprep.mubr.f32.mxu0 0.0
    %116 = vmatmul.mubr.f32.gmra.mrb[0].mxu0 %v49
    %v117 = vpop.f32.mrb[0].mxu0
    %v118 = vadd.f32 0.0, %v117
    %v119 = vpop.f32.mrb[0].mxu0
    %v120 = vadd.f32 0.0, %v119
    %121 = vdwg.mxu0
    %v122 = vmax.f32 %v118, %v120
    %123 = vmax.xlane.f32.xlu0 %v122
    %v124 = vpop.xlane.xlu0 %123
    %vm125 = vcmp.eq.f32.partialorder %v118, %v124
    %vm126 = vcmp.eq.f32.partialorder %v120, %v124
    %v127 = vsel %vm125, -3.4028235e+38, %v118
    %v128 = vsel %vm126, -3.4028235e+38, %v120
    %v129 = vmax.f32 %v127, %v128
    %130 = vmax.xlane.f32.xlu0 %v129
    %v131 = vpop.xlane.xlu0 %130
    %vm132 = vcmp.eq.f32.partialorder %v127, %v131
    %vm133 = vcmp.eq.f32.partialorder %v128, %v131
    %v134 = vsel %vm132, -3.4028235e+38, %v127
    %v135 = vsel %vm133, -3.4028235e+38, %v128
    %v136 = vmax.f32 %v134, %v135
    %137 = vmax.xlane.f32.xlu0 %v136
    %v138 = vpop.xlane.xlu0 %137
    %vm139 = vcmp.eq.f32.partialorder %v134, %v138
    %vm140 = vcmp.eq.f32.partialorder %v135, %v138
    %v141 = vsel %vm139, -3.4028235e+38, %v134
    %v142 = vsel %vm140, -3.4028235e+38, %v135
    %v143 = vmax.f32 %v141, %v142
    %144 = vmax.xlane.f32.xlu0 %v143
    %v145 = vpop.xlane.xlu0 %144
    %vm146 = vcmp.eq.f32.partialorder %v141, %v145
    %vm147 = vcmp.eq.f32.partialorder %v142, %v145
    %v148 = vsel %vm146, -3.4028235e+38, %v141
    %v149 = vsel %vm147, -3.4028235e+38, %v142
    %v150 = vmax.f32 %v148, %v149
    %151 = vmax.xlane.f32.xlu0 %v150
    %v152 = vpop.xlane.xlu0 %151
    %vm153 = vcmp.eq.f32.partialorder %v148, %v152
    %vm154 = vcmp.eq.f32.partialorder %v149, %v152
    %v155 = vsel %vm153, -3.4028235e+38, %v148
    %v156 = vsel %vm154, -3.4028235e+38, %v149
    %v157 = vmax.f32 %v155, %v156
    %158 = vmax.xlane.f32.xlu0 %v157
    %v159 = vpop.xlane.xlu0 %158
    %vm160 = vcmp.eq.f32.partialorder %v155, %v159
    %vm161 = vcmp.eq.f32.partialorder %v156, %v159
    %v162 = vsel %vm160, -3.4028235e+38, %v155
    %v163 = vsel %vm161, -3.4028235e+38, %v156
    %v164 = vmax.f32 %v162, %v163
    %165 = vmax.xlane.f32.xlu0 %v164
    %v166 = vpop.xlane.xlu0 %165
    %vm167 = vcmp.eq.f32.partialorder %v162, %v166
    %vm168 = vcmp.eq.f32.partialorder %v163, %v166
    %v169 = vsel %vm167, -3.4028235e+38, %v162
    %v170 = vsel %vm168, -3.4028235e+38, %v163
    %v171 = vmax.f32 %v169, %v170
    %172 = vmax.xlane.f32.xlu0 %v171
    %v173 = vpop.xlane.xlu0 %172
    %vm174 = vcmp.eq.f32.partialorder %v169, %v173
    %vm175 = vcmp.eq.f32.partialorder %v170, %v173
    %v176 = vsel %vm174, -3.4028235e+38, %v169
    %v177 = vsel %vm175, -3.4028235e+38, %v170
    %v178 = vmax.f32 %v176, %v177
    %179 = vmax.xlane.f32.xlu0 %v178
    %v180 = vpop.xlane.xlu0 %179
    %vm181 = vcmp.eq.f32.partialorder %v176, %v180
    %vm182 = vcmp.eq.f32.partialorder %v177, %v180
    %v183 = vsel %vm181, -3.4028235e+38, %v176
    %v184 = vsel %vm182, -3.4028235e+38, %v177
    %v185 = vmax.f32 %v183, %v184
    %186 = vmax.xlane.f32.xlu0 %v185
    %v187 = vpop.xlane.xlu0 %186
    %vm188 = vcmp.eq.f32.partialorder %v183, %v187
    %vm189 = vcmp.eq.f32.partialorder %v184, %v187
    %v190 = vsel %vm188, -3.4028235e+38, %v183
    %v191 = vsel %vm189, -3.4028235e+38, %v184
    %v192 = vmax.f32 %v190, %v191
    %193 = vmax.xlane.f32.xlu0 %v192
    %v194 = vpop.xlane.xlu0 %193
    %vm195 = vcmp.eq.f32.partialorder %v190, %v194
    %vm196 = vcmp.eq.f32.partialorder %v191, %v194
    %v197 = vsel %vm195, -3.4028235e+38, %v190
    %v198 = vsel %vm196, -3.4028235e+38, %v191
    %v199 = vmax.f32 %v197, %v198
    %200 = vmax.xlane.f32.xlu0 %v199
    %v201 = vpop.xlane.xlu0 %200
    %vm202 = vcmp.eq.f32.partialorder %v197, %v201
    %vm203 = vcmp.eq.f32.partialorder %v198, %v201
    %v204 = vsel %vm202, -3.4028235e+38, %v197
    %v205 = vsel %vm203, -3.4028235e+38, %v198
    %v206 = vmax.f32 %v204, %v205
    %207 = vmax.xlane.f32.xlu0 %v206
    %v208 = vpop.xlane.xlu0 %207
    %vm209 = vcmp.eq.f32.partialorder %v204, %v208
    %vm210 = vcmp.eq.f32.partialorder %v205, %v208
    %v211 = vsel %vm209, -3.4028235e+38, %v204
    %v212 = vsel %vm210, -3.4028235e+38, %v205
    %v213 = vmax.f32 %v211, %v212
    %214 = vmax.xlane.f32.xlu0 %v213
    %v215 = vpop.xlane.xlu0 %214
    %vm216 = vcmp.eq.f32.partialorder %v211, %v215
    %vm217 = vcmp.eq.f32.partialorder %v212, %v215
    %v218 = vsel %vm216, -3.4028235e+38, %v211
    %v219 = vsel %vm217, -3.4028235e+38, %v212
    %v220 = vmax.f32 %v218, %v219
    %221 = vmax.xlane.f32.xlu0 %v220
    %v222 = vpop.xlane.xlu0 %221
    %vm223 = vcmp.eq.f32.partialorder %v218, %v222
    %vm224 = vcmp.eq.f32.partialorder %v219, %v222
    %v225 = vsel %vm223, -3.4028235e+38, %v218
    %v226 = vsel %vm224, -3.4028235e+38, %v219
    %v227 = vmax.f32 %v225, %v226
    %228 = vmax.xlane.f32.xlu0 %v227
    %v229 = vpop.xlane.xlu0 %228
    %vm230 = vcmp.ge.f32.partialorder %v118, %v229
    %vm231 = vcmp.ge.f32.partialorder %v120, %v229
    %v232 = vsel %vm230, %v118, 0.0
    %v233 = vsel %vm231, %v120, 0.0
    %s234 = smul.u32 0, 2
    %s235 = smul.addr %s234, 8
    %s236 = scalar_lea.vmem [#allocation7], %s235
    %237 = vst [vmem:[%s236] sm:$0xff] %v232
    %238 = vst [vmem:[%s236 + $0x8] sm:$0xff] %v233
    // Predicated region
    $region18: #{tpu_custom_call.1} parent=1 // pred_check
      _
    $region19: #{tpu_custom_call.1} parent=1 // pred_check_branch
      %240 = sbr.rel (0) target = $region21
    $region20: #{tpu_custom_call.1} parent=1 // pred_region
      %s242 = ssub.s32 256, 256
      %243 = vsyncadd [#allocation4], %s242
      %s245 = sshll.u32 [#allocation7], 4
      %s246 = int_to_ptr.vmem [resolvable:$true] %s245
      %248 = dma.vmem_to_hbm [thread:$0]  %s246, 256, %s2, [#allocation4]
    $region21: #{tpu_custom_call.1} parent=1 // pred_fallthru
      _
    // Predicated region
    $region22: #{tpu_custom_call.1} parent=1 // pred_check
      _
    $region23: #{tpu_custom_call.1} parent=1 // pred_check_branch
      %250 = sbr.rel (0) target = $region25
    $region24: #{tpu_custom_call.1} parent=1 // pred_region
      %251 = dma.done [#allocation4], 256
    $region25: #{tpu_custom_call.1} parent=1 // pred_fallthru
      _
    %252 = vsyncpa [#allocation3], 1
    %253 = vsyncpa [#allocation6], 1
    %254 = vsyncpa [#allocation4], 1

</llo_original>
